<compile_context>
chip_gen: v7x
topology: tpu7x:2x2x1
jax: 0.10.0
libtpu: 0.0.40
codegen_flags: <defaults>
</compile_context>

<pallas_src>
import math
import functools
import numpy as np

import jax
import jax.numpy as jnp
from jax.experimental import pallas as pl
from jax.experimental.pallas import tpu as pltpu

_LANE = 128


# ----------------------------------------------------------------------------
# Per-generation VMEM budget / tile selection
# ----------------------------------------------------------------------------

@functools.lru_cache(maxsize=None)
def _vmem_limit_bytes():
    # Derive from the chip (v5e/v6e: 128 MiB, v7x: 64 MiB) and leave ~25%
    # headroom for the compiler's double-buffering / internal scratch.
    cap = 64 << 20
    try:
        info = pltpu.get_tpu_info()
        cap = int(getattr(info, "vmem_capacity_bytes", cap))
    except Exception:
        pass
    return max(32 << 20, (cap * 3) // 4)


def _largest_aligned_divisor(n, align, cap):
    """Largest t <= cap with t % align == 0 and n % t == 0; falls back to n."""
    t = min(int(cap), n)
    t -= t % align
    while t >= align:
        if n % t == 0:
            return t
        t -= align
    return n


def _pick_prop_tiles(n, fp):
    budget = _vmem_limit_bytes()
    tk = _largest_aligned_divisor(n, 128, 512)          # lane-aligned K tile
    # bytes ~ 4*(2*tm*tk [adj dbuf] + 2*tk*fp [hw dbuf] + 2*tm*fp [out] + tm*fp [acc])
    avail = budget - 8 * tk * fp
    denom = 4 * (2 * tk + 3 * fp)
    cap = max(8, avail // denom) if avail > 0 else 8
    tm = _largest_aligned_divisor(n, 8, min(cap, 2048))
    return tm, tk


def _pick_xw_tile(n, fin, fp):
    budget = _vmem_limit_bytes()
    avail = budget - 8 * fin * fp
    denom = 4 * (2 * fin + 2 * fp)
    cap = max(8, avail // denom) if avail > 0 else 8
    return _largest_aligned_divisor(n, 8, min(cap, 2048))


def _round_up(x, m):
    return ((x + m - 1) // m) * m


# ----------------------------------------------------------------------------
# Pallas kernels: adjacency construction / normalization / grad transform
# ----------------------------------------------------------------------------

def _diag_mask(n):
    r = jax.lax.broadcasted_iota(jnp.int32, (n, n), 0)
    c = jax.lax.broadcasted_iota(jnp.int32, (n, n), 1)
    return r == c


def _norm_only_kernel(ori_ref, norm_ref):
    # D^{-1/2}(A+I)D^{-1/2} for the un-perturbed adjacency (no zeros streamed).
    a = ori_ref[...]
    n = a.shape[0]
    diag = _diag_mask(n)
    mx = jnp.where(diag, a + 1.0, a)                      # A + I, no eye matmul
    deg_r = jnp.sum(mx, axis=1, keepdims=True)            # (N, 1)
    deg_c = jnp.sum(mx, axis=0, keepdims=True)            # (1, N)
    # TODO(synk): mx is symmetric so deg_c == deg_r; a (N,1)->(1,N) vector
    # transpose would halve the XLU reduction, kept dual-reduce for robust
    # Mosaic lowering at arbitrary N.
    dr = jnp.where(deg_r > 0.0, jax.lax.rsqrt(deg_r), 0.0)
    dc = jnp.where(deg_c > 0.0, jax.lax.rsqrt(deg_c), 0.0)
    norm_ref[...] = dr * mx * dc


def normalize_adj_pallas(ori_adj):
    n = ori_adj.shape[0]
    return pl.pallas_call(
        _norm_only_kernel,
        out_shape=jax.ShapeDtypeStruct((n, n), jnp.float32),
        in_specs=[pl.BlockSpec(memory_space=pltpu.MemorySpace.VMEM)],
        out_specs=pl.BlockSpec(memory_space=pltpu.MemorySpace.VMEM),
        compiler_params=pltpu.CompilerParams(vmem_limit_bytes=_vmem_limit_bytes()),
    )(ori_adj)


def _mod_and_norm_kernel(changes_ref, ori_ref, mod_ref, norm_ref):
    # Fused: modified_adj construction + D^{-1/2}(A+I)D^{-1/2} normalization.
    # TODO(synk): for large N this should be tiled with a 2-D grid (transposed
    # blocks via a swapped index_map + two-pass degree reduction); whole-array
    # is kept for the small demo N.
    c = changes_ref[...]
    n = c.shape[0]
    diag = _diag_mask(n)
    sq = jnp.where(diag, 0.0, c)                          # zero diagonal
    symm = jnp.clip(sq + sq.T, -1.0, 1.0)
    mod = symm + ori_ref[...]
    mod_ref[...] = mod
    mx = jnp.where(diag, mod + 1.0, mod)                  # A + I
    deg_r = jnp.sum(mx, axis=1, keepdims=True)
    deg_c = jnp.sum(mx, axis=0, keepdims=True)
    dr = jnp.where(deg_r > 0.0, jax.lax.rsqrt(deg_r), 0.0)
    dc = jnp.where(deg_c > 0.0, jax.lax.rsqrt(deg_c), 0.0)
    norm_ref[...] = dr * mx * dc


def fused_mod_norm_pallas(adj_changes, ori_adj):
    n = ori_adj.shape[0]
    return pl.pallas_call(
        _mod_and_norm_kernel,
        out_shape=(jax.ShapeDtypeStruct((n, n), jnp.float32),
                   jax.ShapeDtypeStruct((n, n), jnp.float32)),
        in_specs=[pl.BlockSpec(memory_space=pltpu.MemorySpace.VMEM)] * 2,
        out_specs=(pl.BlockSpec(memory_space=pltpu.MemorySpace.VMEM),
                   pl.BlockSpec(memory_space=pltpu.MemorySpace.VMEM)),
        compiler_params=pltpu.CompilerParams(vmem_limit_bytes=_vmem_limit_bytes()),
    )(adj_changes, ori_adj)


def _meta_grad_transform_kernel(grad_ref, adj_ref, out_ref):
    # Fused: g = smoothed*(1-2A); g -= min(g); zero diag; singleton mask; g *= mask.
    a = adj_ref[...]
    n = a.shape[0]
    g = grad_ref[...] * (1.0 - 2.0 * a)
    g = g - jnp.min(g)
    g = jnp.where(_diag_mask(n), 0.0, g)
    deg = jnp.sum(a, axis=0, keepdims=True)               # (1, N)
    degree_one = (deg == 1.0).astype(a.dtype)
    l_and = degree_one * a
    mask = 1.0 - (l_and + l_and.T)
    out_ref[...] = g * mask


def meta_grad_transform_pallas(smoothed_grad, modified_adj):
    n = modified_adj.shape[0]
    return pl.pallas_call(
        _meta_grad_transform_kernel,
        out_shape=jax.ShapeDtypeStruct((n, n), jnp.float32),
        in_specs=[pl.BlockSpec(memory_space=pltpu.MemorySpace.VMEM)] * 2,
        out_specs=pl.BlockSpec(memory_space=pltpu.MemorySpace.VMEM),
        compiler_params=pltpu.CompilerParams(vmem_limit_bytes=_vmem_limit_bytes()),
    )(smoothed_grad, modified_adj)


# ----------------------------------------------------------------------------
# Pallas kernels: GCN forward (hoisted pre-projection + tiled propagation)
# ----------------------------------------------------------------------------

def _xw_kernel(x_ref, w_ref, out_ref):
    out_ref[...] = jnp.dot(x_ref[...], w_ref[...], preferred_element_type=jnp.float32)


def xw_pallas(x, w):
    """Row-tiled (N, fin) @ (fin, fout_padded) pre-projection."""
    n, fin = x.shape
    fp = w.shape[1]
    tm = _pick_xw_tile(n, fin, fp)
    return pl.pallas_call(
        _xw_kernel,
        out_shape=jax.ShapeDtypeStruct((n, fp), jnp.float32),
        grid_spec=pltpu.PrefetchScalarGridSpec(
            num_scalar_prefetch=0,
            grid=(n // tm,),
            in_specs=[pl.BlockSpec((tm, fin), lambda i: (i, 0)),
                      pl.BlockSpec((fin, fp), lambda i: (0, 0))],
            out_specs=pl.BlockSpec((tm, fp), lambda i: (i, 0))),
        compiler_params=pltpu.CompilerParams(
            dimension_semantics=("parallel",),
            vmem_limit_bytes=_vmem_limit_bytes()),
    )(x, w)


def _prop_kernel(adj_ref, hw_ref, out_ref, acc_ref, *,
                 inv_temp, final_logsoftmax, valid_cols):
    # out[i-block] = sum_k adj[i-block, k-block] @ hw[k-block]
    k = pl.program_id(1)

    @pl.when(k == 0)
    def _():
        acc_ref[...] = jnp.zeros_like(acc_ref)

    acc_ref[...] += jnp.dot(adj_ref[...], hw_ref[...],
                            preferred_element_type=jnp.float32)

    @pl.when(k == pl.num_programs(1) - 1)
    def _():
        z = acc_ref[...]
        if final_logsoftmax:
            col = jax.lax.broadcasted_iota(jnp.int32, z.shape, 1)
            valid = col < valid_cols                     # mask padded lanes
            z = jnp.where(valid, z * inv_temp, -jnp.inf)
            m = jnp.max(z, axis=1, keepdims=True)
            e = jnp.where(valid, jnp.exp(z - m), 0.0)
            lse = jnp.log(jnp.sum(e, axis=1, keepdims=True))
            z = jnp.where(valid, z - m - lse, 0.0)
        out_ref[...] = z


def prop_pallas(adj_norm, hw, *, inv_temp=1.0, final_logsoftmax=False,
                valid_cols=None):
    n = adj_norm.shape[0]
    fp = hw.shape[1]
    if valid_cols is None:
        valid_cols = fp
    tm, tk = _pick_prop_tiles(n, fp)
    kern = functools.partial(_prop_kernel, inv_temp=inv_temp,
                             final_logsoftmax=final_logsoftmax,
                             valid_cols=valid_cols)
    return pl.pallas_call(
        kern,
        out_shape=jax.ShapeDtypeStruct((n, fp), jnp.float32),
        grid_spec=pltpu.PrefetchScalarGridSpec(
            num_scalar_prefetch=0,
            grid=(n // tm, n // tk),                       # reduction axis last
            in_specs=[pl.BlockSpec((tm, tk), lambda i, k: (i, k)),
                      pl.BlockSpec((tk, fp), lambda i, k: (k, 0))],
            out_specs=pl.BlockSpec((tm, fp), lambda i, k: (i, 0)),
            scratch_shapes=[pltpu.VMEM((tm, fp), jnp.float32)]),
        compiler_params=pltpu.CompilerParams(
            dimension_semantics=("parallel", "arbitrary"),
            vmem_limit_bytes=_vmem_limit_bytes()),
    )(adj_norm, hw)


def gcn_forward_pallas(adj_norm, x, w1, w2, temp=1.0):
    """2-layer GCN: log_softmax((A_n (A_n (x w1)) w2) / temp), lane-padded."""
    h_true = w1.shape[1]
    c_true = w2.shape[1]
    hp = _round_up(h_true, _LANE)
    cp = _round_up(c_true, _LANE)
    w1p = jnp.pad(w1, ((0, 0), (0, hp - h_true)))          # zero-pad -> padded
    w2p = jnp.pad(w2, ((0, hp - h_true), (0, cp - c_true)))  # cols of hw stay 0
    hw1 = xw_pallas(x, w1p)                                 # (N, Hp)
    h1 = prop_pallas(adj_norm, hw1)                         # (N, Hp)
    hw2 = xw_pallas(h1, w2p)                                # (N, Cp)
    out = prop_pallas(adj_norm, hw2, inv_temp=1.0 / temp,
                      final_logsoftmax=True, valid_cols=c_true)  # (N, Cp)
    return out[:, :c_true]


# ----------------------------------------------------------------------------
# Pure-JAX mirrors (autograd paths; pallas_call is not differentiable)
# ----------------------------------------------------------------------------

def modified_adj_jax(adj_changes, ori_adj):
    sq = adj_changes - jnp.diag(jnp.diag(adj_changes))
    symm = jnp.clip(sq + sq.T, -1.0, 1.0)
    return symm + ori_adj


def normalize_adj_jax(adj):
    mx = adj + jnp.eye(adj.shape[0], dtype=adj.dtype)
    deg = mx.sum(1)
    d = jnp.where(deg > 0.0, deg ** -0.5, 0.0)
    return d[:, None] * mx * d[None, :]


def gcn_forward_jax(adj_norm, x, w1, w2, temp=1.0):
    h = adj_norm @ (x @ w1)          # reassociated to match the Pallas kernels
    h = adj_norm @ (h @ w2)
    return jax.nn.log_softmax(h / temp, axis=1)


def nll_loss(log_probs, labels):
    return -jnp.mean(log_probs[jnp.arange(log_probs.shape[0]), labels])


def _meta_grad_core(adj_changes, ori_adj, features, idx_unlabeled, labels_st, w1, w2):
    def loss_fn(ac):
        mod = modified_adj_jax(ac, ori_adj)
        an = normalize_adj_jax(mod)
        out = gcn_forward_jax(an, features, w1, w2, temp=1000.0)
        return nll_loss(out[idx_unlabeled], labels_st[idx_unlabeled])
    return jax.grad(loss_fn)(adj_changes)


@functools.partial(jax.jit, static_argnames=("train_iters",))
def _inner_train_jit(features, adj_norm, labels, idx_train, w1, w2, v1, v2,
                     lr, momentum, *, train_iters):
    def loss_fn(a, b):
        out = gcn_forward_jax(adj_norm, features, a, b)
        return nll_loss(out[idx_train], labels[idx_train])

    grad_fn = jax.grad(loss_fn, argnums=(0, 1))

    def body(_, carry):
        w1, w2, v1, v2 = carry
        g1, g2 = grad_fn(w1, w2)
        v1 = momentum * v1 + g1
        v2 = momentum * v2 + g2
        return (w1 - lr * v1, w2 - lr * v2, v1, v2)

    return jax.lax.fori_loop(0, train_iters, body, (w1, w2, v1, v2))


@jax.jit
def _smoothed_grad_jit(adj_changes, ori_adj, features, noise_batch,
                       idx_unlabeled, labels_st, w1, w2, smooth_scale):
    # base meta-grad + vmap-batched noisy meta-grads (one device dispatch)
    base = _meta_grad_core(adj_changes, ori_adj, features, idx_unlabeled,
                           labels_st, w1, w2)
    noisy = jax.vmap(lambda nz: _meta_grad_core(adj_changes, ori_adj,
                                                features + nz, idx_unlabeled,
                                                labels_st, w1, w2))(noise_batch)
    return base + smooth_scale * jnp.sum(noisy, axis=0)


@jax.jit
def _override_candidate_grads_jit(adj_changes, ori_adj, features, idx_unlabeled,
                                  labels_st, w1, w2, rows, cols, vals_batch,
                                  modified_adj, pair_r, pair_c):
    # All `steps` override evaluations for one wait-list batch in a single
    # vmapped dispatch; only the needed (steps, P) gradient entries are returned.
    def single(vals):
        def loss_fn(ac):
            mod = modified_adj_jax(ac, ori_adj)
            mod = mod.at[rows, cols].set(vals)   # constants => grad cut (as torch)
            an = normalize_adj_jax(mod)
            out = gcn_forward_jax(an, features, w1, w2, temp=1000.0)
            return nll_loss(out[idx_unlabeled], labels_st[idx_unlabeled])
        g = jax.grad(loss_fn)(adj_changes)
        g = g * (1.0 - 2.0 * modified_adj)
        return g[pair_r, pair_c], g[pair_c, pair_r]
    return jax.vmap(single)(vals_batch)


# ----------------------------------------------------------------------------
# AtkSE forward (JAX / Pallas)
# ----------------------------------------------------------------------------

class AtkSEPallas:
    def __init__(self, nfeat, hidden_sizes, nclass, nnodes, train_iters,
                 lambda_=0.5, lr=0.1, momentum=0.9, mom=0.7,
                 dropnode=0.0, gauss_noise=0.01, smooth_loop=1,
                 wait_list=2, intervals=0.5, candidates=2, seed=0):
        assert len(hidden_sizes) == 1, "Pallas GCN kernels are written for 2 layers"
        self.nfeat = nfeat
        self.hidden_sizes = list(hidden_sizes)
        self.nclass = nclass
        self.nnodes = nnodes
        self.train_iters = train_iters
        self.lambda_ = lambda_
        self.lr = lr
        self.momentum = momentum
        self.mom = mom
        self.dropnode = dropnode
        self.gauss_noise = gauss_noise
        self.smooth_loop = smooth_loop
        self.wait_list = wait_list
        self.intervals = intervals
        self.candidates = candidates
        self.with_bias = False
        self.with_relu = False

        self.adj_changes = jnp.zeros((nnodes, nnodes), jnp.float32)
        self.momentum_grad = None
        self._init_key = jax.random.PRNGKey(seed)
        self._w_init, self._b_init = self._build_init_params()
        self._initialize()

    def _build_init_params(self):
        key = self._init_key
        sizes = [self.nfeat] + self.hidden_sizes + [self.nclass]
        w_init, b_init = [], []
        for i in range(len(sizes) - 1):
            key, kw, kb = jax.random.split(key, 3)
            stdv = 1.0 / math.sqrt(sizes[i + 1])
            w_init.append(jax.random.uniform(kw, (sizes[i], sizes[i + 1]),
                                             jnp.float32, -stdv, stdv))
            b_init.append(jax.random.uniform(kb, (sizes[i + 1],), jnp.float32,
                                             -stdv, stdv))
        return w_init, b_init

    def _initialize(self):
        # deterministic re-init from cached initial parameters
        self.weights = list(self._w_init)
        self.biases = list(self._b_init)          # unused (with_bias=False)
        self.w_velocities = [jnp.zeros_like(w) for w in self._w_init]
        self.b_velocities = [jnp.zeros_like(b) for b in self._b_init]

    # TODO(synk): torch.autograd.grad inner loop — gradients taken with jax.grad
    # over the pure-JAX GCN mirror (pallas_call is not differentiable).
    def inner_train(self, features, adj_norm, idx_train, labels):
        self._initialize()
        w1, w2 = self.weights
        v1, v2 = self.w_velocities
        w1, w2, v1, v2 = _inner_train_jit(
            features, adj_norm, labels, idx_train, w1, w2, v1, v2,
            jnp.float32(self.lr), jnp.float32(self.momentum),
            train_iters=self.train_iters)
        self.weights = [w1, w2]
        self.w_velocities = [v1, v2]

    def _candidate_search(self, idxes, is_full_order, modified_adj, ori_adj,
                          features, idx_unlabeled, labels_st):
        # TODO(synk): host-side data-dependent candidate-selection control flow
        # stays in Python; per-batch meta-gradients run batched on device.
        N = self.nnodes
        w1, w2 = self.weights
        interval = self.intervals
        steps = int(1.0 / interval)
        candidate_list, wait_pairs, grad_sum = [], [], []
        for index in range(idxes.shape[0]):
            flat = int(idxes[index])
            xi, yi = flat // N, flat % N
            if (xi * N + yi) in candidate_list or (yi * N + xi) in candidate_list:
                continue
            wait_pairs.append((xi, yi))
            candidate_list.append(flat)
            if len(wait_pairs) == self.wait_list:
                pair_r = jnp.asarray([p[0] for p in wait_pairs], jnp.int32)
                pair_c = jnp.asarray([p[1] for p in wait_pairs], jnp.int32)
                mod_vals = np.asarray(modified_adj[pair_r, pair_c])  # tiny gather
                rows = jnp.concatenate([pair_r, pair_c])
                cols = jnp.concatenate([pair_c, pair_r])
                vals_np = np.stack([
                    np.concatenate(
                        [np.where(mod_vals == 0.0, interval * k,
                                  1.0 - interval * k)] * 2)
                    for k in range(steps)]).astype(np.float32)       # (steps, 2P)
                g1, g2 = _override_candidate_grads_jit(
                    self.adj_changes, ori_adj, features, idx_unlabeled,
                    labels_st, w1, w2, rows, cols, jnp.asarray(vals_np),
                    modified_adj, pair_r, pair_c)
                g1 = np.asarray(g1)
                g2 = np.asarray(g2)                                   # (steps, P)
                for ci in range(len(wait_pairs)):
                    sign = 1.0 if mod_vals[ci] == 0.0 else -1.0
                    s = 0.0
                    for step in range(steps):
                        s += sign * (interval * g1[step, ci]
                                     + interval * g2[step, ci])
                    grad_sum.append(float(s))
                wait_pairs = []
                if len(candidate_list) >= self.candidates:
                    order = np.argsort(grad_sum)[::-1]
                    return [candidate_list[o] for o in order]
        return candidate_list if (is_full_order and candidate_list) else None

    def forward(self, features, ori_adj, labels, idx_train, idx_unlabeled,
                perturbations):
        N = self.nnodes

        # normalize the original adjacency (normalize-only kernel: no zeros stream)
        adj_norm = normalize_adj_pallas(ori_adj)
        self.inner_train(features, adj_norm, idx_train, labels)
        w1, w2 = self.weights
        output = gcn_forward_pallas(adj_norm, features, w1, w2)
        labels_self_training = jnp.argmax(output, axis=1)
        labels_self_training = labels_self_training.at[idx_train].set(labels[idx_train])

        result = None
        noise_key = jax.random.PRNGKey(123)
        for _ in range(perturbations):
            modified_adj, adj_norm = fused_mod_norm_pallas(self.adj_changes, ori_adj)
            self.inner_train(features, adj_norm, idx_train, labels)
            w1, w2 = self.weights

            # meta-grad + vmap-batched noise meta-grads in one dispatch
            noise_key, sub = jax.random.split(noise_key)
            noise_batch = self.gauss_noise * jax.random.normal(
                sub, (self.smooth_loop,) + features.shape, features.dtype)
            smoothed_grad = _smoothed_grad_jit(
                self.adj_changes, ori_adj, features, noise_batch,
                idx_unlabeled, labels_self_training, w1, w2,
                jnp.float32(0.2 / self.smooth_loop))

            adj_meta_grad = meta_grad_transform_pallas(smoothed_grad, modified_adj)

            if self.momentum_grad is not None:
                self.momentum_grad = adj_meta_grad + self.mom * self.momentum_grad
            else:
                self.momentum_grad = adj_meta_grad

            structural_grad = self.momentum_grad + self.momentum_grad.T
            flat_abs = jnp.abs(structural_grad.reshape(-1))
            # transfer only a prefix of the sorted order (full order as fallback)
            k = int(min(N * N, max(64, 8 * max(self.candidates, self.wait_list))))
            idx_prefix = np.asarray(jnp.argsort(-flat_abs)[:k])
            cands = self._candidate_search(idx_prefix, k == N * N, modified_adj,
                                           ori_adj, features, idx_unlabeled,
                                           labels_self_training)
            if cands is None:
                idx_full = np.asarray(jnp.argsort(-flat_abs))
                cands = self._candidate_search(idx_full, True, modified_adj,
                                               ori_adj, features, idx_unlabeled,
                                               labels_self_training)

            row_idx = cands[0] // N
            col_idx = cands[0] % N
            delta = float(-2.0 * modified_adj[row_idx, col_idx] + 1.0)
            self.adj_changes = self.adj_changes.at[row_idx, col_idx].add(delta)
            self.adj_changes = self.adj_changes.at[col_idx, row_idx].add(delta)
            result = self.adj_changes + ori_adj

        return result


# ----------------------------------------------------------------------------
# main
# ----------------------------------------------------------------------------

if __name__ == "__main__":
    key = jax.random.PRNGKey(0)
    N, F, H, C = 16, 32, 16, 4

    k1, k2, k3 = jax.random.split(key, 3)
    features = jax.random.normal(k1, (N, F), jnp.float32)
    up = (jax.random.uniform(k2, (N, N)) < 0.3).astype(jnp.float32)
    up = jnp.triu(up, k=1)
    ori_adj = up + up.T                      # symmetric 0/1 adjacency, zero diag
    labels = jax.random.randint(k3, (N,), 0, C)
    idx_train = jnp.arange(0, N // 2)
    idx_unlabeled = jnp.arange(N // 2, N)

    model = AtkSEPallas(nfeat=F, hidden_sizes=[H], nclass=C, nnodes=N,
                        train_iters=3, lr=0.1, momentum=0.9,
                        gauss_noise=0.01, smooth_loop=1,
                        wait_list=2, intervals=0.5, candidates=2, seed=0)

    result = model.forward(features, ori_adj, labels, idx_train, idx_unlabeled,
                           perturbations=1)
    result = jax.block_until_ready(result)
    assert result.shape == (N, N) and result.dtype == jnp.float32
    assert bool(jnp.all(jnp.isfinite(result)))
    print("KERNEL_OK")
</pallas_src>

<mosaic_0001>
module attributes {stable_mosaic.version = 11 : i64} {
  func.func @_norm_only_kernel(%arg0: memref<16x16xf32, #tpu.memory_space<vmem>>, %arg1: memref<16x16xf32, #tpu.memory_space<vmem>>) attributes {dimension_semantics = [], scalar_prefetch = 0 : i64, scratch_operands = 0 : i64, tpu.core_type = #tpu.core_type<tc>} {
    %c0 = arith.constant 0 : index
    %c0_0 = arith.constant 0 : index
    %0 = vector.load %arg0[%c0, %c0_0] : memref<16x16xf32, #tpu.memory_space<vmem>>, vector<16x16xf32>
    %1 = tpu.iota {dimensions = array<i32: 0>} : vector<16x16xi32>
    %2 = tpu.iota {dimensions = array<i32: 1>} : vector<16x16xi32>
    %3 = arith.cmpi eq, %1, %2 : vector<16x16xi32>
    %cst = arith.constant 1.000000e+00 : f32
    %4 = vector.broadcast %cst : f32 to vector<16x16xf32>
    %5 = arith.addf %0, %4 : vector<16x16xf32>
    %6 = arith.select %3, %5, %0 : vector<16x16xi1>, vector<16x16xf32>
    %cst_1 = arith.constant dense<0.000000e+00> : vector<16xf32>
    %7 = vector.multi_reduction <add>, %6, %cst_1 [1] : vector<16x16xf32> to vector<16xf32>
    %8 = vector.shape_cast %7 : vector<16xf32> to vector<16x1xf32>
    %cst_2 = arith.constant dense<0.000000e+00> : vector<16xf32>
    %9 = vector.multi_reduction <add>, %6, %cst_2 [0] : vector<16x16xf32> to vector<16xf32>
    %10 = vector.shape_cast %9 : vector<16xf32> to vector<1x16xf32>
    %cst_3 = arith.constant 0.000000e+00 : f32
    %11 = vector.broadcast %cst_3 : f32 to vector<16x1xf32>
    %12 = arith.cmpf ogt, %8, %11 : vector<16x1xf32>
    %13 = math.rsqrt %8 : vector<16x1xf32>
    %cst_4 = arith.constant 0.000000e+00 : f32
    %14 = vector.broadcast %cst_4 : f32 to vector<16x1xf32>
    %15 = arith.select %12, %13, %14 : vector<16x1xi1>, vector<16x1xf32>
    %cst_5 = arith.constant 0.000000e+00 : f32
    %16 = vector.broadcast %cst_5 : f32 to vector<1x16xf32>
    %17 = arith.cmpf ogt, %10, %16 : vector<1x16xf32>
    %18 = math.rsqrt %10 : vector<1x16xf32>
    %cst_6 = arith.constant 0.000000e+00 : f32
    %19 = vector.broadcast %cst_6 : f32 to vector<1x16xf32>
    %20 = arith.select %17, %18, %19 : vector<1x16xi1>, vector<1x16xf32>
    %21 = vector.broadcast %15 : vector<16x1xf32> to vector<16x16xf32>
    %22 = arith.mulf %21, %6 : vector<16x16xf32>
    %23 = vector.broadcast %20 : vector<1x16xf32> to vector<16x16xf32>
    %24 = arith.mulf %22, %23 : vector<16x16xf32>
    %c0_7 = arith.constant 0 : index
    %c0_8 = arith.constant 0 : index
    %25 = vector.load %arg1[%c0_7, %c0_8] : memref<16x16xf32, #tpu.memory_space<vmem>>, vector<16x16xf32>
    tpu.vector_store %arg1[%c0_7, %c0_8], %24 {strides = array<i32>} : memref<16x16xf32, #tpu.memory_space<vmem>>, vector<16x16xf32>,
    return
  }
}

</mosaic_0001>

<llo_original>
// kernel: tpu_custom_call.1
$region0: #{tpu_custom_call.1}
  #allocation0 [shape = 'u32[]', space=smem, size = 0x4, offset = 0x4, fixed_abs, tag = 'smem constant byte address 0x4 - core index']
  #allocation1 [shape = 'u32[144,128]{1,0:T(1,128)}', space=vmem, size = 0x12000, scoped, tag = 'internal scratch']
  %s0 = inlined_call_operand.hbm [shape: f32[16,16], index: 0, kind: input, shape index: {}]
  %s1 = inlined_call_operand.hbm [shape: f32[16,16], index: 1, kind: output, shape index: {}]
  %s2 = sld [smem:[#allocation0]]
  $region18: #{tpu_custom_call.1} parent=0
    _
  %s4 = ssub.s32 1, %s2
  %s5 = scalar_select 0, %s4, %s2
  $region1: #{tpu_custom_call.1} parent=0
    #allocation2 [shape = 'u8[8192]{0}', space=vmem, size = 0x2000, scoped, tag = 'input window, operand 0, single buffered']
    #allocation3 [shape = 's32[1]{0}', space=sflag, size = 0x4, scoped, tag = 'scoped memory for tpu_custom_call.1']
    #allocation4 [shape = 's32[1]{0}', space=sflag, size = 0x4, scoped, tag = 'scoped memory for tpu_custom_call.1']
    #allocation5 [shape = 'u8[8192]{0}', space=vmem, size = 0x2000, scoped, tag = 'output window, operand 0, single buffered']
    %6 = vsyncpa [#allocation3], 0
    %7 = vsyncpa [#allocation4], 0
    // Predicated region
    $region2: #{tpu_custom_call.1} parent=1 // pred_check
      _
    $region3: #{tpu_custom_call.1} parent=1 // pred_check_branch
      %9 = sbr.rel (0) target = $region5
    $region4: #{tpu_custom_call.1} parent=1 // pred_region
      %s11 = ssub.s32 256, 256
      %12 = vsyncadd [#allocation3], %s11
      %s13 = sshll.u32 [#allocation2], 4
      %s14 = int_to_ptr.vmem [resolvable:$true] %s13
      %19 = dma.hbm_to_vmem [thread:$0]  %s0, 256, %s14, [#allocation3], 128, 128, 8
    $region5: #{tpu_custom_call.1} parent=1 // pred_fallthru
      _
    // Predicated region
    $region6: #{tpu_custom_call.1} parent=1 // pred_check
      _
    $region7: #{tpu_custom_call.1} parent=1 // pred_check_branch
      %21 = sbr.rel (0) target = $region9
    $region8: #{tpu_custom_call.1} parent=1 // pred_region
      %22 = dma.done [#allocation3], 256
    $region9: #{tpu_custom_call.1} parent=1 // pred_fallthru
      _
    %v23 = vld [vmem:[#allocation2] sm:$0xff]
    %v24 = vld [vmem:[#allocation2 + $0x8] sm:$0xff]
    %v25 = vlaneseq
    %v26 = vshrl.u32 %v25, 7
    %v27 = vadd.s32 %v26, 8
    %v28 = vlaneseq
    %v29 = vand.u32 %v28, 127
    %vm30 = vcmp.eq.s32.totalorder %v26, %v29
    %vm31 = vcmp.eq.s32.totalorder %v27, %v29
    %v32 = vadd.f32 %v23, 1.0
    %v33 = vadd.f32 %v24, 1.0
    %v34 = vsel %vm30, %v32, %v23
    %v35 = vsel %vm31, %v33, %v24
    %vm36 = vcmask 130048
    %v37 = vsel %vm36, %v34, 0.0
    %38 = vadd.xlane.f32.xlu0 %v37
    %v39 = vpop.xlane.xlu0 %38
    %v40 = vsel %vm36, %v35, 0.0
    %41 = vadd.xlane.f32.xlu0 %v40
    %v42 = vpop.xlane.xlu0 %41
    %v43 = vadd.f32 %v37, %v40
    %v44 = vrot.slane %v43, 4
    %v45 = vadd.f32 %v43, %v44
    %v46 = vrot.slane %v45, 2
    %v47 = vadd.f32 %v45, %v46
    %v48 = vrot.slane %v47, 1
    %v49 = vadd.f32 %v47, %v48
    %vm50 = vcmp.gt.f32.partialorder %v39, 0.0
    %vm51 = vcmp.gt.f32.partialorder %v42, 0.0
    %v52 = vrsqrt.pop %v39
    %v53 = vrsqrt.pop %v42
    %v54 = vsel %vm50, %v52, 0.0
    %v55 = vsel %vm51, %v53, 0.0
    %vm56 = vcmp.gt.f32.partialorder %v49, 0.0
    %v57 = vrsqrt.pop %v49
    %v58 = vsel %vm56, %v57, 0.0
    %v59 = vmul.f32 %v54, %v34
    %v60 = vmul.f32 %v55, %v35
    %v61 = vmul.f32 %v59, %v58
    %v62 = vmul.f32 %v60, %v58
    %63 = vst.msk [vmem:[#allocation5] sm:$0xff] %vm36, %v61
    %64 = vst.msk [vmem:[#allocation5 + $0x8] sm:$0xff] %vm36, %v62
    // Predicated region
    $region10: #{tpu_custom_call.1} parent=1 // pred_check
      _
    $region11: #{tpu_custom_call.1} parent=1 // pred_check_branch
      %66 = sbr.rel (0) target = $region13
    $region12: #{tpu_custom_call.1} parent=1 // pred_region
      %s68 = ssub.s32 256, 256
      %69 = vsyncadd [#allocation4], %s68
      %s70 = sshll.u32 [#allocation5], 4
      %s71 = int_to_ptr.vmem [resolvable:$true] %s70
      %76 = dma.vmem_to_hbm [thread:$0]  %s71, 256, %s1, [#allocation4], 128, 128, 8
    $region13: #{tpu_custom_call.1} parent=1 // pred_fallthru
      _
    // Predicated region
    $region14: #{tpu_custom_call.1} parent=1 // pred_check
      _
    $region15: #{tpu_custom_call.1} parent=1 // pred_check_branch
      %78 = sbr.rel (0) target = $region17
    $region16: #{tpu_custom_call.1} parent=1 // pred_region
      %79 = dma.done [#allocation4], 256
    $region17: #{tpu_custom_call.1} parent=1 // pred_fallthru
      _
    %80 = vsyncpa [#allocation3], 1
    %81 = vsyncpa [#allocation4], 1

</llo_original>
